<compile_context>
chip_gen: v5e
topology: v5e:2x2
jax: 0.10.0
libtpu: 0.0.40
codegen_flags: <defaults>
</compile_context>

<pallas_src>
import functools

import jax
import jax.numpy as jnp
from jax.experimental import pallas as pl
from jax.experimental.pallas import tpu as pltpu


def _spec(shape):
    nd = len(shape)
    return pl.BlockSpec(shape, lambda i, _nd=nd: (0,) * _nd)


# ------------------------------ kernel bodies ------------------------------- #

def _encoder_body(x_ref, cnn_refs, fcw_ref, fcb_ref, batch):
    """CNN encoder + encoder_fc.  Returns encoded activations as (batch, nc) f32.

    Activations live as (channels, pixels): channels on sublanes, pixels on lanes.
    Pixel order is hierarchical (tap1, ..., tap_n, hf, wf, b), so each stride-2 conv
    consumes 4 *contiguous* lane slices (in-VMEM im2col for free).
    """
    w0_ref, s0_ref = cnn_refs[0]
    # Block 0: 1x1 conv (pointwise matmul) + folded-BN shift + ReLU (f32 epilogue).
    cur = jnp.maximum(
        jnp.dot(w0_ref[...], x_ref[...], preferred_element_type=jnp.float32)
        + s0_ref[...],
        0.0,
    )                                                            # (C1, P) f32
    pix = cur.shape[1]

    # Blocks 1..n-1: 2x2 stride-2 convs.  Sublane-restack the 4 contiguous tap
    # slices into (4*Cin, P/4) and do ONE matmul against the tap-stacked weight.
    # Restack in f32 (8-row tile-aligned for any Cin); cast to bf16 once after.
    for w_ref, s_ref in cnn_refs[1:]:
        pix_out = pix // 4
        x_stack = jnp.concatenate(
            [cur[:, t * pix_out:(t + 1) * pix_out] for t in range(4)], axis=0)
        cur = jnp.maximum(
            jnp.dot(w_ref[...], x_stack.astype(jnp.bfloat16),
                    preferred_element_type=jnp.float32)
            + s_ref[...],
            0.0,
        )
        pix = pix_out

    # Flatten + encoder_fc: restack (c_last, S*B) -> (S*c_last, B) once and contract
    # with K = S*c_last in a single MXU push (weight columns pre-ordered (s, c)).
    n_spatial = pix // batch
    x_fc = jnp.concatenate(
        [cur[:, s * batch:(s + 1) * batch] for s in range(n_spatial)], axis=0)
    enc_nb = (
        jnp.dot(fcw_ref[...], x_fc.astype(jnp.bfloat16),
                preferred_element_type=jnp.float32)
        + fcb_ref[...]
    )                                                            # (nc, B) f32

    # Hand off to the batch-major decoder orientation: (B, nc) = I_B @ enc_nb^T,
    # computed on the MXU via the standard transposed-RHS dot_general path.
    row = jax.lax.broadcasted_iota(jnp.int32, (batch, batch), 0)
    col = jax.lax.broadcasted_iota(jnp.int32, (batch, batch), 1)
    eye_b = (row == col).astype(jnp.float32)
    enc_bn = jax.lax.dot_general(
        eye_b, enc_nb, (((1,), (1,)), ((), ())),
        preferred_element_type=jnp.float32)                      # (B, nc) f32
    return enc_bn


def _lstm_decoder_body(x_bn, h, c, wih_ref, whh_ref, b_ref, wdec_ref, bdec_ref,
                       hidden):
    """Single LSTM step + decoder_fc, batch-on-sublane / features-on-lane."""
    gates = (
        jnp.dot(x_bn.astype(jnp.bfloat16), wih_ref[...],
                preferred_element_type=jnp.float32)
        + jnp.dot(h.astype(jnp.bfloat16), whh_ref[...],
                  preferred_element_type=jnp.float32)
        + b_ref[...]
    )                                                            # (B, 4H) f32, lane-dense
    sig = jax.nn.sigmoid(gates)                                  # one dense EUP pass
    th = jnp.tanh(gates)                                         # one dense EUP pass
    # PyTorch gate order (input, forget, cell g, output) -> lane slices of width H.
    i_g = sig[:, 0 * hidden:1 * hidden]
    f_g = sig[:, 1 * hidden:2 * hidden]
    g_g = th[:, 2 * hidden:3 * hidden]
    o_g = sig[:, 3 * hidden:4 * hidden]
    c_new = f_g * c + i_g * g_g
    h_new = o_g * jnp.tanh(c_new)
    dec = (
        jnp.dot(h_new.astype(jnp.bfloat16), wdec_ref[...],
                preferred_element_type=jnp.float32)
        + bdec_ref[...]
    )                                                            # (B, nc) f32
    return dec, h_new, c_new


def _fused_kernel(*refs, n_blocks, hidden):
    """encode() + one decode() step fused: encoder output never leaves VMEM."""
    x_ref = refs[0]
    cnn_refs = [(refs[1 + 2 * j], refs[2 + 2 * j]) for j in range(n_blocks)]
    base = 1 + 2 * n_blocks
    fcw_ref, fcb_ref = refs[base], refs[base + 1]
    wih_ref, whh_ref, b_ref = refs[base + 2], refs[base + 3], refs[base + 4]
    wdec_ref, bdec_ref = refs[base + 5], refs[base + 6]
    h_ref, c_ref = refs[base + 7], refs[base + 8]
    enc_ref, dec_ref, h_out_ref, c_out_ref = refs[base + 9:base + 13]

    batch = enc_ref.shape[0]
    enc = _encoder_body(x_ref, cnn_refs, fcw_ref, fcb_ref, batch)
    dec, h_new, c_new = _lstm_decoder_body(
        enc, h_ref[...], c_ref[...], wih_ref, whh_ref, b_ref, wdec_ref, bdec_ref,
        hidden)
    enc_ref[...] = enc
    dec_ref[...] = dec
    h_out_ref[...] = h_new
    c_out_ref[...] = c_new


def _encode_kernel(*refs, n_blocks):
    x_ref = refs[0]
    cnn_refs = [(refs[1 + 2 * j], refs[2 + 2 * j]) for j in range(n_blocks)]
    fcw_ref = refs[1 + 2 * n_blocks]
    fcb_ref = refs[2 + 2 * n_blocks]
    enc_ref = refs[3 + 2 * n_blocks]
    enc_ref[...] = _encoder_body(x_ref, cnn_refs, fcw_ref, fcb_ref,
                                 enc_ref.shape[0])


def _decode_kernel(x_ref, h_ref, c_ref, wih_ref, whh_ref, b_ref, wdec_ref, bdec_ref,
                   dec_ref, h_out_ref, c_out_ref, *, hidden):
    dec, h_new, c_new = _lstm_decoder_body(
        x_ref[...], h_ref[...], c_ref[...], wih_ref, whh_ref, b_ref, wdec_ref,
        bdec_ref, hidden)
    dec_ref[...] = dec
    h_out_ref[...] = h_new
    c_out_ref[...] = c_new


# ------------------------------ layout helpers ------------------------------ #

def _permute_pixels(x_nchw, n_s2):
    """NCHW -> (C, P) with hierarchical pixel order (tap1, ..., tap_{n_s2}, hf, wf, b).

    tap_j = (kh_j, kw_j) are the 2x2/stride-2 patch offsets consumed by the j-th
    stride-2 conv stage; making them the outermost pixel axes turns every in-kernel
    im2col into a contiguous lane slice.
    """
    b, c, h, w = x_nchw.shape
    if n_s2 == 0:
        return jnp.transpose(x_nchw, (1, 2, 3, 0)).reshape(c, h * w * b)
    f = 2 ** n_s2
    hf, wf = h // f, w // f
    xr = x_nchw.reshape((b, c, hf) + (2,) * n_s2 + (wf,) + (2,) * n_s2)
    # axis of kh_j (bit weight 2^(j-1)) is 3 + n_s2 - j ; kw_j is 4 + 2*n_s2 - j
    perm = [1]
    for j in range(1, n_s2 + 1):
        perm += [3 + n_s2 - j, 4 + 2 * n_s2 - j]
    perm += [2, 3 + n_s2, 0]
    return jnp.transpose(xr, perm).reshape(c, (4 ** n_s2) * hf * wf * b)


# ------------------------------ model definition ----------------------------- #

def calculate_channel_sizes(image_channels, max_filters, num_layers):
    sizes = [(image_channels, max_filters // (2 ** (num_layers - 1)))]
    for _ in range(1, num_layers):
        prev = sizes[-1][-1]
        sizes.append((prev, prev * 2))
    return sizes


def init_params(key, *, num_classes, input_image_size, input_channels,
                cnn_output_channels, cnn_blocks, rnn_hidden_size):
    if rnn_hidden_size % 8 != 0:
        raise ValueError("rnn_hidden_size must be a multiple of 8 for aligned "
                         "lane-sliced LSTM gates")
    sizes = calculate_channel_sizes(input_channels, cnn_output_channels, cnn_blocks)
    eps = 1e-5
    k = key
    params = {"cnn": []}
    kernel_size = 1
    for i, (cin, cout) in enumerate(sizes):
        k, k1, k2, k3, k4, k5 = jax.random.split(k, 6)
        w = 0.1 * jax.random.normal(k1, (cout, cin, kernel_size, kernel_size),
                                    jnp.float32)
        gamma = 1.0 + 0.1 * jax.random.normal(k2, (cout,), jnp.float32)
        beta = 0.1 * jax.random.normal(k3, (cout,), jnp.float32)
        run_mean = 0.1 * jax.random.normal(k4, (cout,), jnp.float32)
        run_var = jnp.abs(jax.random.normal(k5, (cout,), jnp.float32)) + 0.5
        scale = gamma / jnp.sqrt(run_var + eps)
        shift = beta - run_mean * scale
        # Fold BN scale into the conv weight (inference-mode BN).
        w_folded = w * scale[:, None, None, None]
        if kernel_size == 1:
            w_k = w_folded[:, :, 0, 0]                                  # (Cout, Cin)
        else:
            # Tap-stacked along K: (Cout, 4*Cin), column index = (kh*2+kw)*Cin + cin.
            w_k = jnp.transpose(w_folded, (0, 2, 3, 1)).reshape(cout, 4 * cin)
        params["cnn"].append({
            "w": w_k.astype(jnp.bfloat16),
            "shift": shift.reshape(cout, 1).astype(jnp.float32),
        })
        if i == 0:
            kernel_size = 2

    image_size = input_image_size // (2 ** (cnn_blocks - 1))
    n_spatial = image_size * image_size
    c_last = sizes[-1][1]

    k, k1, k2 = jax.random.split(k, 3)
    wfc = 0.05 * jax.random.normal(k1, (num_classes, c_last * n_spatial), jnp.float32)
    bfc = 0.05 * jax.random.normal(k2, (num_classes,), jnp.float32)
    # Reorder encoder_fc columns from PyTorch flatten order (c, s) to (s, c) so the
    # in-kernel sublane restack of the final activation maps 1:1 onto K.
    wfc_r = wfc.reshape(num_classes, c_last, n_spatial).transpose(0, 2, 1)
    params["enc_fc_w"] = wfc_r.reshape(num_classes, n_spatial * c_last
                                       ).astype(jnp.bfloat16)       # (nc, S*c_last)
    params["enc_fc_b"] = bfc.reshape(num_classes, 1)

    H = rnn_hidden_size
    k, k1, k2, k3, k4 = jax.random.split(k, 5)
    w_ih = 0.1 * jax.random.normal(k1, (4 * H, num_classes), jnp.float32)  # weight_ih_l0
    w_hh = 0.1 * jax.random.normal(k2, (4 * H, H), jnp.float32)            # weight_hh_l0
    b_ih = 0.1 * jax.random.normal(k3, (4 * H,), jnp.float32)
    b_hh = 0.1 * jax.random.normal(k4, (4 * H,), jnp.float32)
    params["lstm_wih_t"] = jnp.transpose(w_ih).astype(jnp.bfloat16)        # (nc, 4H)
    params["lstm_whh_t"] = jnp.transpose(w_hh).astype(jnp.bfloat16)        # (H, 4H)
    params["lstm_b"] = (b_ih + b_hh).reshape(1, 4 * H)

    k, k1, k2 = jax.random.split(k, 3)
    w_dec = 0.1 * jax.random.normal(k1, (num_classes, H), jnp.float32)     # decoder_fc.weight
    b_dec = 0.1 * jax.random.normal(k2, (num_classes,), jnp.float32)
    params["dec_fc_w_t"] = jnp.transpose(w_dec).astype(jnp.bfloat16)       # (H, nc)
    params["dec_fc_b"] = b_dec.reshape(1, num_classes)
    return params


def init_hidden_state(batch_size, rnn_hidden_size):
    return (
        jnp.zeros((1, batch_size, rnn_hidden_size), jnp.float32),
        jnp.zeros((1, batch_size, rnn_hidden_size), jnp.float32),
    )


# -------------------------------- wrappers ----------------------------------- #

@jax.jit
def encode_decode(params, x_nchw, decoder_hidden):
    """Fused encode() -> decode() (single step) in one pallas_call."""
    cnn = params["cnn"]
    n_blocks = len(cnn)
    batch = x_nchw.shape[0]
    nc = params["enc_fc_b"].shape[0]
    H = params["lstm_whh_t"].shape[0]
    h0, c0 = decoder_hidden

    x_perm = _permute_pixels(x_nchw, n_blocks - 1).astype(jnp.bfloat16)   # (C, P)

    inputs = [x_perm]
    for blk in cnn:
        inputs += [blk["w"], blk["shift"]]
    inputs += [params["enc_fc_w"], params["enc_fc_b"],
               params["lstm_wih_t"], params["lstm_whh_t"], params["lstm_b"],
               params["dec_fc_w_t"], params["dec_fc_b"],
               h0[0], c0[0]]

    kernel = functools.partial(_fused_kernel, n_blocks=n_blocks, hidden=H)
    enc, dec, h_new, c_new = pl.pallas_call(
        kernel,
        out_shape=(
            jax.ShapeDtypeStruct((batch, nc), jnp.float32),
            jax.ShapeDtypeStruct((batch, nc), jnp.float32),
            jax.ShapeDtypeStruct((batch, H), jnp.float32),
            jax.ShapeDtypeStruct((batch, H), jnp.float32),
        ),
        grid=(1,),
        in_specs=[_spec(a.shape) for a in inputs],
        out_specs=(
            _spec((batch, nc)), _spec((batch, nc)),
            _spec((batch, H)), _spec((batch, H)),
        ),
        compiler_params=pltpu.CompilerParams(dimension_semantics=("arbitrary",)),
    )(*inputs)

    encoded = enc.reshape(batch, 1, nc)
    dec_out = dec.reshape(batch, 1, nc)
    hidden = (h_new[None, ...], c_new[None, ...])
    return encoded, dec_out, hidden


@jax.jit
def encode(params, x_nchw):
    # x_nchw: (B, C, H, W) f32 -> (B, 1, num_classes)
    cnn = params["cnn"]
    n_blocks = len(cnn)
    batch = x_nchw.shape[0]
    nc = params["enc_fc_b"].shape[0]

    x_perm = _permute_pixels(x_nchw, n_blocks - 1).astype(jnp.bfloat16)

    inputs = [x_perm]
    for blk in cnn:
        inputs += [blk["w"], blk["shift"]]
    inputs += [params["enc_fc_w"], params["enc_fc_b"]]

    kernel = functools.partial(_encode_kernel, n_blocks=n_blocks)
    enc = pl.pallas_call(
        kernel,
        out_shape=jax.ShapeDtypeStruct((batch, nc), jnp.float32),
        grid=(1,),
        in_specs=[_spec(a.shape) for a in inputs],
        out_specs=_spec((batch, nc)),
        compiler_params=pltpu.CompilerParams(dimension_semantics=("arbitrary",)),
    )(*inputs)
    return enc.reshape(batch, 1, nc)


@jax.jit
def decode(params, decoder_input, decoder_hidden):
    # decoder_input: (B, 1, num_classes); hidden: (h0, c0) each (1, B, H).
    # Single time step (T=1); batch-major throughout (no host transposes).
    h0, c0 = decoder_hidden
    batch = decoder_input.shape[0]
    nc = params["dec_fc_b"].shape[1]
    H = params["lstm_whh_t"].shape[0]

    x = decoder_input[:, 0, :]                                    # (B, nc)
    kernel = functools.partial(_decode_kernel, hidden=H)
    dec, h_new, c_new = pl.pallas_call(
        kernel,
        out_shape=(
            jax.ShapeDtypeStruct((batch, nc), jnp.float32),
            jax.ShapeDtypeStruct((batch, H), jnp.float32),
            jax.ShapeDtypeStruct((batch, H), jnp.float32),
        ),
        grid=(1,),
        in_specs=[
            _spec((batch, nc)), _spec((batch, H)), _spec((batch, H)),
            _spec((nc, 4 * H)), _spec((H, 4 * H)), _spec((1, 4 * H)),
            _spec((H, nc)), _spec((1, nc)),
        ],
        out_specs=(
            _spec((batch, nc)), _spec((batch, H)), _spec((batch, H)),
        ),
        input_output_aliases={1: 1, 2: 2},   # h/c update in place
        compiler_params=pltpu.CompilerParams(dimension_semantics=("arbitrary",)),
    )(x, h0[0], c0[0], params["lstm_wih_t"], params["lstm_whh_t"], params["lstm_b"],
      params["dec_fc_w_t"], params["dec_fc_b"])

    dec_out = dec.reshape(batch, 1, nc)
    hidden = (h_new[None, ...], c_new[None, ...])
    return dec_out, hidden


# ---------------------------------- main ------------------------------------ #

if __name__ == "__main__":
    # Small config consistent with the module's constructor arithmetic.
    num_classes = 8
    input_image_size = 16
    input_channels = 4
    cnn_output_channels = 32
    cnn_blocks = 3
    rnn_hidden_size = 32
    batch = 2

    key = jax.random.PRNGKey(0)
    k_params, k_x = jax.random.split(key)
    params = init_params(
        k_params,
        num_classes=num_classes,
        input_image_size=input_image_size,
        input_channels=input_channels,
        cnn_output_channels=cnn_output_channels,
        cnn_blocks=cnn_blocks,
        rnn_hidden_size=rnn_hidden_size,
    )

    x = jax.random.normal(
        k_x, (batch, input_channels, input_image_size, input_image_size), jnp.float32)

    hidden0 = init_hidden_state(batch, rnn_hidden_size)

    # Fused encode + first decode step (one kernel launch).
    encoded, dec_out, hidden = encode_decode(params, x, hidden0)
    # Standalone encode (same encoder body) and a second autoregressive decode step.
    enc_only = encode(params, x)
    dec_out2, hidden2 = decode(params, dec_out, hidden)

    jax.block_until_ready((encoded, dec_out, hidden, enc_only, dec_out2, hidden2))

    assert encoded.shape == (batch, 1, num_classes)
    assert enc_only.shape == (batch, 1, num_classes)
    assert dec_out.shape == (batch, 1, num_classes)
    assert dec_out2.shape == (batch, 1, num_classes)
    assert hidden[0].shape == (1, batch, rnn_hidden_size)
    assert hidden[1].shape == (1, batch, rnn_hidden_size)
    assert hidden2[0].shape == (1, batch, rnn_hidden_size)
    assert hidden2[1].shape == (1, batch, rnn_hidden_size)
    assert bool(jnp.allclose(enc_only, encoded, atol=1e-5)), \
        "fused and standalone encoders disagree"

    print("KERNEL_OK")
</pallas_src>

<mosaic_0001>
module attributes {stable_mosaic.version = 11 : i64} {
  func.func @_fused_kernel(%arg0: i32, %arg1: memref<4x512xbf16, #tpu.memory_space<vmem>>, %arg2: memref<8x4xbf16, #tpu.memory_space<vmem>>, %arg3: memref<8x1xf32, #tpu.memory_space<vmem>>, %arg4: memref<16x32xbf16, #tpu.memory_space<vmem>>, %arg5: memref<16x1xf32, #tpu.memory_space<vmem>>, %arg6: memref<32x64xbf16, #tpu.memory_space<vmem>>, %arg7: memref<32x1xf32, #tpu.memory_space<vmem>>, %arg8: memref<8x512xbf16, #tpu.memory_space<vmem>>, %arg9: memref<8x1xf32, #tpu.memory_space<vmem>>, %arg10: memref<8x128xbf16, #tpu.memory_space<vmem>>, %arg11: memref<32x128xbf16, #tpu.memory_space<vmem>>, %arg12: memref<1x128xf32, #tpu.memory_space<vmem>>, %arg13: memref<32x8xbf16, #tpu.memory_space<vmem>>, %arg14: memref<1x8xf32, #tpu.memory_space<vmem>>, %arg15: memref<2x32xf32, #tpu.memory_space<vmem>>, %arg16: memref<2x32xf32, #tpu.memory_space<vmem>>, %arg17: memref<2x8xf32, #tpu.memory_space<vmem>>, %arg18: memref<2x8xf32, #tpu.memory_space<vmem>>, %arg19: memref<2x32xf32, #tpu.memory_space<vmem>>, %arg20: memref<2x32xf32, #tpu.memory_space<vmem>>) attributes {dimension_semantics = [#tpu.dimension_semantics<arbitrary>], iteration_bounds = array<i64: 1>, scalar_prefetch = 0 : i64, scratch_operands = 0 : i64, tpu.core_type = #tpu.core_type<tc>, window_params = [{pipeline_mode = #tpu.pipeline_mode<synchronous>, transform_indices = @transform_0, window_bounds = array<i64: 4, 512>}, {pipeline_mode = #tpu.pipeline_mode<synchronous>, transform_indices = @transform_1, window_bounds = array<i64: 8, 4>}, {pipeline_mode = #tpu.pipeline_mode<synchronous>, transform_indices = @transform_2, window_bounds = array<i64: 8, 1>}, {pipeline_mode = #tpu.pipeline_mode<synchronous>, transform_indices = @transform_3, window_bounds = array<i64: 16, 32>}, {pipeline_mode = #tpu.pipeline_mode<synchronous>, transform_indices = @transform_4, window_bounds = array<i64: 16, 1>}, {pipeline_mode = #tpu.pipeline_mode<synchronous>, transform_indices = @transform_5, window_bounds = array<i64: 32, 64>}, {pipeline_mode = #tpu.pipeline_mode<synchronous>, transform_indices = @transform_6, window_bounds = array<i64: 32, 1>}, {pipeline_mode = #tpu.pipeline_mode<synchronous>, transform_indices = @transform_7, window_bounds = array<i64: 8, 512>}, {pipeline_mode = #tpu.pipeline_mode<synchronous>, transform_indices = @transform_8, window_bounds = array<i64: 8, 1>}, {pipeline_mode = #tpu.pipeline_mode<synchronous>, transform_indices = @transform_9, window_bounds = array<i64: 8, 128>}, {pipeline_mode = #tpu.pipeline_mode<synchronous>, transform_indices = @transform_10, window_bounds = array<i64: 32, 128>}, {pipeline_mode = #tpu.pipeline_mode<synchronous>, transform_indices = @transform_11, window_bounds = array<i64: 1, 128>}, {pipeline_mode = #tpu.pipeline_mode<synchronous>, transform_indices = @transform_12, window_bounds = array<i64: 32, 8>}, {pipeline_mode = #tpu.pipeline_mode<synchronous>, transform_indices = @transform_13, window_bounds = array<i64: 1, 8>}, {pipeline_mode = #tpu.pipeline_mode<synchronous>, transform_indices = @transform_14, window_bounds = array<i64: 2, 32>}, {pipeline_mode = #tpu.pipeline_mode<synchronous>, transform_indices = @transform_15, window_bounds = array<i64: 2, 32>}, {pipeline_mode = #tpu.pipeline_mode<synchronous>, transform_indices = @transform_16, window_bounds = array<i64: 2, 8>}, {pipeline_mode = #tpu.pipeline_mode<synchronous>, transform_indices = @transform_17, window_bounds = array<i64: 2, 8>}, {pipeline_mode = #tpu.pipeline_mode<synchronous>, transform_indices = @transform_18, window_bounds = array<i64: 2, 32>}, {pipeline_mode = #tpu.pipeline_mode<synchronous>, transform_indices = @transform_19, window_bounds = array<i64: 2, 32>}]} {
    %c0 = arith.constant 0 : index
    %c0_0 = arith.constant 0 : index
    %0 = vector.load %arg2[%c0, %c0_0] : memref<8x4xbf16, #tpu.memory_space<vmem>>, vector<8x4xbf16>
    %c0_1 = arith.constant 0 : index
    %c0_2 = arith.constant 0 : index
    %1 = vector.load %arg1[%c0_1, %c0_2] : memref<4x512xbf16, #tpu.memory_space<vmem>>, vector<4x512xbf16>
    %cst = arith.constant dense<0.000000e+00> : vector<8x512xf32>
    %2 = tpu.matmul %0, %1, %cst {dimension_numbers = #tpu.dot_dimension_numbers<[1], [0], [0], [1], [0, 0, 1, 1], [], []>} : vector<8x4xbf16>, vector<4x512xbf16>, vector<8x512xf32> -> vector<8x512xf32>
    %c0_3 = arith.constant 0 : index
    %c0_4 = arith.constant 0 : index
    %3 = vector.load %arg3[%c0_3, %c0_4] : memref<8x1xf32, #tpu.memory_space<vmem>>, vector<8x1xf32>
    %4 = vector.broadcast %3 : vector<8x1xf32> to vector<8x512xf32>
    %5 = arith.addf %2, %4 : vector<8x512xf32>
    %cst_5 = arith.constant 0.000000e+00 : f32
    %6 = vector.broadcast %cst_5 : f32 to vector<8x512xf32>
    %7 = arith.maximumf %5, %6 : vector<8x512xf32>
    %8 = vector.extract_strided_slice %7 {offsets = [0, 0], sizes = [8, 128], strides = [1, 1]} : vector<8x512xf32> to vector<8x128xf32>
    %9 = vector.extract_strided_slice %7 {offsets = [0, 128], sizes = [8, 128], strides = [1, 1]} : vector<8x512xf32> to vector<8x128xf32>
    %10 = vector.extract_strided_slice %7 {offsets = [0, 256], sizes = [8, 128], strides = [1, 1]} : vector<8x512xf32> to vector<8x128xf32>
    %11 = vector.extract_strided_slice %7 {offsets = [0, 384], sizes = [8, 128], strides = [1, 1]} : vector<8x512xf32> to vector<8x128xf32>
    %12 = tpu.concatenate %8, %9, %10, %11 in 0 : vector<8x128xf32>, vector<8x128xf32>, vector<8x128xf32>, vector<8x128xf32> -> vector<32x128xf32>
    %c0_6 = arith.constant 0 : index
    %c0_7 = arith.constant 0 : index
    %13 = vector.load %arg4[%c0_6, %c0_7] : memref<16x32xbf16, #tpu.memory_space<vmem>>, vector<16x32xbf16>
    %14 = arith.truncf %12 : vector<32x128xf32> to vector<32x128xbf16>
    %cst_8 = arith.constant dense<0.000000e+00> : vector<16x128xf32>
    %15 = tpu.matmul %13, %14, %cst_8 {dimension_numbers = #tpu.dot_dimension_numbers<[1], [0], [0], [1], [0, 0, 1, 1], [], []>} : vector<16x32xbf16>, vector<32x128xbf16>, vector<16x128xf32> -> vector<16x128xf32>
    %c0_9 = arith.constant 0 : index
    %c0_10 = arith.constant 0 : index
    %16 = vector.load %arg5[%c0_9, %c0_10] : memref<16x1xf32, #tpu.memory_space<vmem>>, vector<16x1xf32>
    %17 = vector.broadcast %16 : vector<16x1xf32> to vector<16x128xf32>
    %18 = arith.addf %15, %17 : vector<16x128xf32>
    %cst_11 = arith.constant 0.000000e+00 : f32
    %19 = vector.broadcast %cst_11 : f32 to vector<16x128xf32>
    %20 = arith.maximumf %18, %19 : vector<16x128xf32>
    %21 = vector.extract_strided_slice %20 {offsets = [0, 0], sizes = [16, 32], strides = [1, 1]} : vector<16x128xf32> to vector<16x32xf32>
    %22 = vector.extract_strided_slice %20 {offsets = [0, 32], sizes = [16, 32], strides = [1, 1]} : vector<16x128xf32> to vector<16x32xf32>
    %23 = vector.extract_strided_slice %20 {offsets = [0, 64], sizes = [16, 32], strides = [1, 1]} : vector<16x128xf32> to vector<16x32xf32>
    %24 = vector.extract_strided_slice %20 {offsets = [0, 96], sizes = [16, 32], strides = [1, 1]} : vector<16x128xf32> to vector<16x32xf32>
    %25 = tpu.concatenate %21, %22, %23, %24 in 0 : vector<16x32xf32>, vector<16x32xf32>, vector<16x32xf32>, vector<16x32xf32> -> vector<64x32xf32>
    %c0_12 = arith.constant 0 : index
    %c0_13 = arith.constant 0 : index
    %26 = vector.load %arg6[%c0_12, %c0_13] : memref<32x64xbf16, #tpu.memory_space<vmem>>, vector<32x64xbf16>
    %27 = arith.truncf %25 : vector<64x32xf32> to vector<64x32xbf16>
    %cst_14 = arith.constant dense<0.000000e+00> : vector<32x32xf32>
    %28 = tpu.matmul %26, %27, %cst_14 {dimension_numbers = #tpu.dot_dimension_numbers<[1], [0], [0], [1], [0, 0, 1, 1], [], []>} : vector<32x64xbf16>, vector<64x32xbf16>, vector<32x32xf32> -> vector<32x32xf32>
    %c0_15 = arith.constant 0 : index
    %c0_16 = arith.constant 0 : index
    %29 = vector.load %arg7[%c0_15, %c0_16] : memref<32x1xf32, #tpu.memory_space<vmem>>, vector<32x1xf32>
    %30 = vector.broadcast %29 : vector<32x1xf32> to vector<32x32xf32>
    %31 = arith.addf %28, %30 : vector<32x32xf32>
    %cst_17 = arith.constant 0.000000e+00 : f32
    %32 = vector.broadcast %cst_17 : f32 to vector<32x32xf32>
    %33 = arith.maximumf %31, %32 : vector<32x32xf32>
    %34 = vector.extract_strided_slice %33 {offsets = [0, 0], sizes = [32, 2], strides = [1, 1]} : vector<32x32xf32> to vector<32x2xf32>
    %35 = vector.extract_strided_slice %33 {offsets = [0, 2], sizes = [32, 2], strides = [1, 1]} : vector<32x32xf32> to vector<32x2xf32>
    %36 = vector.extract_strided_slice %33 {offsets = [0, 4], sizes = [32, 2], strides = [1, 1]} : vector<32x32xf32> to vector<32x2xf32>
    %37 = vector.extract_strided_slice %33 {offsets = [0, 6], sizes = [32, 2], strides = [1, 1]} : vector<32x32xf32> to vector<32x2xf32>
    %38 = vector.extract_strided_slice %33 {offsets = [0, 8], sizes = [32, 2], strides = [1, 1]} : vector<32x32xf32> to vector<32x2xf32>
    %39 = vector.extract_strided_slice %33 {offsets = [0, 10], sizes = [32, 2], strides = [1, 1]} : vector<32x32xf32> to vector<32x2xf32>
    %40 = vector.extract_strided_slice %33 {offsets = [0, 12], sizes = [32, 2], strides = [1, 1]} : vector<32x32xf32> to vector<32x2xf32>
    %41 = vector.extract_strided_slice %33 {offsets = [0, 14], sizes = [32, 2], strides = [1, 1]} : vector<32x32xf32> to vector<32x2xf32>
    %42 = vector.extract_strided_slice %33 {offsets = [0, 16], sizes = [32, 2], strides = [1, 1]} : vector<32x32xf32> to vector<32x2xf32>
    %43 = vector.extract_strided_slice %33 {offsets = [0, 18], sizes = [32, 2], strides = [1, 1]} : vector<32x32xf32> to vector<32x2xf32>
    %44 = vector.extract_strided_slice %33 {offsets = [0, 20], sizes = [32, 2], strides = [1, 1]} : vector<32x32xf32> to vector<32x2xf32>
    %45 = vector.extract_strided_slice %33 {offsets = [0, 22], sizes = [32, 2], strides = [1, 1]} : vector<32x32xf32> to vector<32x2xf32>
    %46 = vector.extract_strided_slice %33 {offsets = [0, 24], sizes = [32, 2], strides = [1, 1]} : vector<32x32xf32> to vector<32x2xf32>
    %47 = vector.extract_strided_slice %33 {offsets = [0, 26], sizes = [32, 2], strides = [1, 1]} : vector<32x32xf32> to vector<32x2xf32>
    %48 = vector.extract_strided_slice %33 {offsets = [0, 28], sizes = [32, 2], strides = [1, 1]} : vector<32x32xf32> to vector<32x2xf32>
    %49 = vector.extract_strided_slice %33 {offsets = [0, 30], sizes = [32, 2], strides = [1, 1]} : vector<32x32xf32> to vector<32x2xf32>
    %50 = tpu.concatenate %34, %35, %36, %37, %38, %39, %40, %41, %42, %43, %44, %45, %46, %47, %48, %49 in 0 : vector<32x2xf32>, vector<32x2xf32>, vector<32x2xf32>, vector<32x2xf32>, vector<32x2xf32>, vector<32x2xf32>, vector<32x2xf32>, vector<32x2xf32>, vector<32x2xf32>, vector<32x2xf32>, vector<32x2xf32>, vector<32x2xf32>, vector<32x2xf32>, vector<32x2xf32>, vector<32x2xf32>, vector<32x2xf32> -> vector<512x2xf32>
    %c0_18 = arith.constant 0 : index
    %c0_19 = arith.constant 0 : index
    %51 = vector.load %arg8[%c0_18, %c0_19] : memref<8x512xbf16, #tpu.memory_space<vmem>>, vector<8x512xbf16>
    %52 = arith.truncf %50 : vector<512x2xf32> to vector<512x2xbf16>
    %cst_20 = arith.constant dense<0.000000e+00> : vector<8x2xf32>
    %53 = tpu.matmul %51, %52, %cst_20 {dimension_numbers = #tpu.dot_dimension_numbers<[1], [0], [0], [1], [0, 0, 1, 1], [], []>} : vector<8x512xbf16>, vector<512x2xbf16>, vector<8x2xf32> -> vector<8x2xf32>
    %c0_21 = arith.constant 0 : index
    %c0_22 = arith.constant 0 : index
    %54 = vector.load %arg9[%c0_21, %c0_22] : memref<8x1xf32, #tpu.memory_space<vmem>>, vector<8x1xf32>
    %55 = vector.broadcast %54 : vector<8x1xf32> to vector<8x2xf32>
    %56 = arith.addf %53, %55 : vector<8x2xf32>
    %57 = tpu.iota {dimensions = array<i32: 0>} : vector<2x2xi32>
    %58 = tpu.iota {dimensions = array<i32: 1>} : vector<2x2xi32>
    %59 = arith.cmpi eq, %57, %58 : vector<2x2xi32>
    %60 = arith.extui %59 : vector<2x2xi1> to vector<2x2xi32>
    %61 = arith.sitofp %60 : vector<2x2xi32> to vector<2x2xf32>
    %cst_23 = arith.constant dense<0.000000e+00> : vector<2x8xf32>
    %62 = tpu.matmul %61, %56, %cst_23 {dimension_numbers = #tpu.dot_dimension_numbers<[1], [1], [0], [0], [0, 0, 1, 0], [], []>} : vector<2x2xf32>, vector<8x2xf32>, vector<2x8xf32> -> vector<2x8xf32>
    %c0_24 = arith.constant 0 : index
    %c0_25 = arith.constant 0 : index
    %63 = vector.load %arg15[%c0_24, %c0_25] : memref<2x32xf32, #tpu.memory_space<vmem>>, vector<2x32xf32>
    %c0_26 = arith.constant 0 : index
    %c0_27 = arith.constant 0 : index
    %64 = vector.load %arg16[%c0_26, %c0_27] : memref<2x32xf32, #tpu.memory_space<vmem>>, vector<2x32xf32>
    %65 = arith.truncf %62 : vector<2x8xf32> to vector<2x8xbf16>
    %c0_28 = arith.constant 0 : index
    %c0_29 = arith.constant 0 : index
    %66 = vector.load %arg10[%c0_28, %c0_29] : memref<8x128xbf16, #tpu.memory_space<vmem>>, vector<8x128xbf16>
    %cst_30 = arith.constant dense<0.000000e+00> : vector<2x128xf32>
    %67 = tpu.matmul %65, %66, %cst_30 {dimension_numbers = #tpu.dot_dimension_numbers<[1], [0], [0], [1], [0, 0, 1, 1], [], []>} : vector<2x8xbf16>, vector<8x128xbf16>, vector<2x128xf32> -> vector<2x128xf32>
    %68 = arith.truncf %63 : vector<2x32xf32> to vector<2x32xbf16>
    %c0_31 = arith.constant 0 : index
    %c0_32 = arith.constant 0 : index
    %69 = vector.load %arg11[%c0_31, %c0_32] : memref<32x128xbf16, #tpu.memory_space<vmem>>, vector<32x128xbf16>
    %cst_33 = arith.constant dense<0.000000e+00> : vector<2x128xf32>
    %70 = tpu.matmul %68, %69, %cst_33 {dimension_numbers = #tpu.dot_dimension_numbers<[1], [0], [0], [1], [0, 0, 1, 1], [], []>} : vector<2x32xbf16>, vector<32x128xbf16>, vector<2x128xf32> -> vector<2x128xf32>
    %71 = arith.addf %67, %70 : vector<2x128xf32>
    %c0_34 = arith.constant 0 : index
    %c0_35 = arith.constant 0 : index
    %72 = vector.load %arg12[%c0_34, %c0_35] : memref<1x128xf32, #tpu.memory_space<vmem>>, vector<1x128xf32>
    %73 = vector.broadcast %72 : vector<1x128xf32> to vector<2x128xf32>
    %74 = arith.addf %71, %73 : vector<2x128xf32>
    %75 = arith.negf %74 : vector<2x128xf32>
    %76 = math.exp %75 : vector<2x128xf32>
    %cst_36 = arith.constant 1.000000e+00 : f32
    %77 = vector.broadcast %cst_36 : f32 to vector<2x128xf32>
    %78 = arith.addf %77, %76 : vector<2x128xf32>
    %79 = arith.divf %77, %78 : vector<2x128xf32>
    %80 = math.tanh %74 : vector<2x128xf32>
    %81 = vector.extract_strided_slice %79 {offsets = [0, 0], sizes = [2, 32], strides = [1, 1]} : vector<2x128xf32> to vector<2x32xf32>
    %82 = vector.extract_strided_slice %79 {offsets = [0, 32], sizes = [2, 32], strides = [1, 1]} : vector<2x128xf32> to vector<2x32xf32>
    %83 = vector.extract_strided_slice %80 {offsets = [0, 64], sizes = [2, 32], strides = [1, 1]} : vector<2x128xf32> to vector<2x32xf32>
    %84 = vector.extract_strided_slice %79 {offsets = [0, 96], sizes = [2, 32], strides = [1, 1]} : vector<2x128xf32> to vector<2x32xf32>
    %85 = arith.mulf %82, %64 : vector<2x32xf32>
    %86 = arith.mulf %81, %83 : vector<2x32xf32>
    %87 = arith.addf %85, %86 : vector<2x32xf32>
    %88 = math.tanh %87 : vector<2x32xf32>
    %89 = arith.mulf %84, %88 : vector<2x32xf32>
    %90 = arith.truncf %89 : vector<2x32xf32> to vector<2x32xbf16>
    %c0_37 = arith.constant 0 : index
    %c0_38 = arith.constant 0 : index
    %91 = vector.load %arg13[%c0_37, %c0_38] : memref<32x8xbf16, #tpu.memory_space<vmem>>, vector<32x8xbf16>
    %cst_39 = arith.constant dense<0.000000e+00> : vector<2x8xf32>
    %92 = tpu.matmul %90, %91, %cst_39 {dimension_numbers = #tpu.dot_dimension_numbers<[1], [0], [0], [1], [0, 0, 1, 1], [], []>} : vector<2x32xbf16>, vector<32x8xbf16>, vector<2x8xf32> -> vector<2x8xf32>
    %c0_40 = arith.constant 0 : index
    %c0_41 = arith.constant 0 : index
    %93 = vector.load %arg14[%c0_40, %c0_41] : memref<1x8xf32, #tpu.memory_space<vmem>>, vector<1x8xf32>
    %94 = vector.broadcast %93 : vector<1x8xf32> to vector<2x8xf32>
    %95 = arith.addf %92, %94 : vector<2x8xf32>
    %c0_42 = arith.constant 0 : index
    %c0_43 = arith.constant 0 : index
    %96 = vector.load %arg17[%c0_42, %c0_43] : memref<2x8xf32, #tpu.memory_space<vmem>>, vector<2x8xf32>
    tpu.vector_store %arg17[%c0_42, %c0_43], %62 {strides = array<i32>} : memref<2x8xf32, #tpu.memory_space<vmem>>, vector<2x8xf32>,
    %c0_44 = arith.constant 0 : index
    %c0_45 = arith.constant 0 : index
    %97 = vector.load %arg18[%c0_44, %c0_45] : memref<2x8xf32, #tpu.memory_space<vmem>>, vector<2x8xf32>
    tpu.vector_store %arg18[%c0_44, %c0_45], %95 {strides = array<i32>} : memref<2x8xf32, #tpu.memory_space<vmem>>, vector<2x8xf32>,
    %c0_46 = arith.constant 0 : index
    %c0_47 = arith.constant 0 : index
    %98 = vector.load %arg19[%c0_46, %c0_47] : memref<2x32xf32, #tpu.memory_space<vmem>>, vector<2x32xf32>
    tpu.vector_store %arg19[%c0_46, %c0_47], %89 {strides = array<i32>} : memref<2x32xf32, #tpu.memory_space<vmem>>, vector<2x32xf32>,
    %c0_48 = arith.constant 0 : index
    %c0_49 = arith.constant 0 : index
    %99 = vector.load %arg20[%c0_48, %c0_49] : memref<2x32xf32, #tpu.memory_space<vmem>>, vector<2x32xf32>
    tpu.vector_store %arg20[%c0_48, %c0_49], %87 {strides = array<i32>} : memref<2x32xf32, #tpu.memory_space<vmem>>, vector<2x32xf32>,
    return
  }
  func.func @transform_0(%arg0: i32) -> (i32, i32) {
    %c0_i32 = arith.constant 0 : i32
    %c0_i32_0 = arith.constant 0 : i32
    %c0_i32_1 = arith.constant 0 : i32
    return %c0_i32, %c0_i32_0 : i32, i32
  }
  func.func @transform_1(%arg0: i32) -> (i32, i32) {
    %c0_i32 = arith.constant 0 : i32
    %c0_i32_0 = arith.constant 0 : i32
    %c0_i32_1 = arith.constant 0 : i32
    return %c0_i32, %c0_i32_0 : i32, i32
  }
  func.func @transform_2(%arg0: i32) -> (i32, i32) {
    %c0_i32 = arith.constant 0 : i32
    %c0_i32_0 = arith.constant 0 : i32
    %c0_i32_1 = arith.constant 0 : i32
    return %c0_i32, %c0_i32_0 : i32, i32
  }
  func.func @transform_3(%arg0: i32) -> (i32, i32) {
    %c0_i32 = arith.constant 0 : i32
    %c0_i32_0 = arith.constant 0 : i32
    %c0_i32_1 = arith.constant 0 : i32
    return %c0_i32, %c0_i32_0 : i32, i32
  }
  func.func @transform_4(%arg0: i32) -> (i32, i32) {
    %c0_i32 = arith.constant 0 : i32
    %c0_i32_0 = arith.constant 0 : i32
    %c0_i32_1 = arith.constant 0 : i32
    return %c0_i32, %c0_i32_0 : i32, i32
  }
  func.func @transform_5(%arg0: i32) -> (i32, i32) {
    %c0_i32 = arith.constant 0 : i32
    %c0_i32_0 = arith.constant 0 : i32
    %c0_i32_1 = arith.constant 0 : i32
    return %c0_i32, %c0_i32_0 : i32, i32
  }
  func.func @transform_6(%arg0: i32) -> (i32, i32) {
    %c0_i32 = arith.constant 0 : i32
    %c0_i32_0 = arith.constant 0 : i32
    %c0_i32_1 = arith.constant 0 : i32
    return %c0_i32, %c0_i32_0 : i32, i32
  }
  func.func @transform_7(%arg0: i32) -> (i32, i32) {
    %c0_i32 = arith.constant 0 : i32
    %c0_i32_0 = arith.constant 0 : i32
    %c0_i32_1 = arith.constant 0 : i32
    return %c0_i32, %c0_i32_0 : i32, i32
  }
  func.func @transform_8(%arg0: i32) -> (i32, i32) {
    %c0_i32 = arith.constant 0 : i32
    %c0_i32_0 = arith.constant 0 : i32
    %c0_i32_1 = arith.constant 0 : i32
    return %c0_i32, %c0_i32_0 : i32, i32
  }
  func.func @transform_9(%arg0: i32) -> (i32, i32) {
    %c0_i32 = arith.constant 0 : i32
    %c0_i32_0 = arith.constant 0 : i32
    %c0_i32_1 = arith.constant 0 : i32
    return %c0_i32, %c0_i32_0 : i32, i32
  }
  func.func @transform_10(%arg0: i32) -> (i32, i32) {
    %c0_i32 = arith.constant 0 : i32
    %c0_i32_0 = arith.constant 0 : i32
    %c0_i32_1 = arith.constant 0 : i32
    return %c0_i32, %c0_i32_0 : i32, i32
  }
  func.func @transform_11(%arg0: i32) -> (i32, i32) {
    %c0_i32 = arith.constant 0 : i32
    %c0_i32_0 = arith.constant 0 : i32
    %c0_i32_1 = arith.constant 0 : i32
    return %c0_i32, %c0_i32_0 : i32, i32
  }
  func.func @transform_12(%arg0: i32) -> (i32, i32) {
    %c0_i32 = arith.constant 0 : i32
    %c0_i32_0 = arith.constant 0 : i32
    %c0_i32_1 = arith.constant 0 : i32
    return %c0_i32, %c0_i32_0 : i32, i32
  }
  func.func @transform_13(%arg0: i32) -> (i32, i32) {
    %c0_i32 = arith.constant 0 : i32
    %c0_i32_0 = arith.constant 0 : i32
    %c0_i32_1 = arith.constant 0 : i32
    return %c0_i32, %c0_i32_0 : i32, i32
  }
  func.func @transform_14(%arg0: i32) -> (i32, i32) {
    %c0_i32 = arith.constant 0 : i32
    %c0_i32_0 = arith.constant 0 : i32
    %c0_i32_1 = arith.constant 0 : i32
    return %c0_i32, %c0_i32_0 : i32, i32
  }
  func.func @transform_15(%arg0: i32) -> (i32, i32) {
    %c0_i32 = arith.constant 0 : i32
    %c0_i32_0 = arith.constant 0 : i32
    %c0_i32_1 = arith.constant 0 : i32
    return %c0_i32, %c0_i32_0 : i32, i32
  }
  func.func @transform_16(%arg0: i32) -> (i32, i32) {
    %c0_i32 = arith.constant 0 : i32
    %c0_i32_0 = arith.constant 0 : i32
    %c0_i32_1 = arith.constant 0 : i32
    return %c0_i32, %c0_i32_0 : i32, i32
  }
  func.func @transform_17(%arg0: i32) -> (i32, i32) {
    %c0_i32 = arith.constant 0 : i32
    %c0_i32_0 = arith.constant 0 : i32
    %c0_i32_1 = arith.constant 0 : i32
    return %c0_i32, %c0_i32_0 : i32, i32
  }
  func.func @transform_18(%arg0: i32) -> (i32, i32) {
    %c0_i32 = arith.constant 0 : i32
    %c0_i32_0 = arith.constant 0 : i32
    %c0_i32_1 = arith.constant 0 : i32
    return %c0_i32, %c0_i32_0 : i32, i32
  }
  func.func @transform_19(%arg0: i32) -> (i32, i32) {
    %c0_i32 = arith.constant 0 : i32
    %c0_i32_0 = arith.constant 0 : i32
    %c0_i32_1 = arith.constant 0 : i32
    return %c0_i32, %c0_i32_0 : i32, i32
  }
}

</mosaic_0001>

<llo_original>
// kernel: encode_decode.1
$region0: #{encode_decode.1}
  #allocation0 [shape = 'u32[]', space=smem, size = 0x4, offset = 0x4, fixed_abs, tag = 'smem constant byte address 0x4 - core index']
  #allocation1 [shape = 'u32[72,128]{1,0:T(1,128)}', space=vmem, size = 0x9000, scoped, tag = 'internal scratch']
  %s0 = inlined_call_operand.vmem [shape: bf16[4,512], index: 0, kind: input, shape index: {}]
  %s1 = inlined_call_operand.vmem [shape: bf16[8,4], index: 1, kind: input, shape index: {}]
  %s2 = inlined_call_operand.vmem [shape: f32[8,1], index: 2, kind: input, shape index: {}]
  %s3 = inlined_call_operand.vmem [shape: bf16[16,32], index: 3, kind: input, shape index: {}]
  %s4 = inlined_call_operand.vmem [shape: f32[16,1], index: 4, kind: input, shape index: {}]
  %s5 = inlined_call_operand.vmem [shape: bf16[32,64], index: 5, kind: input, shape index: {}]
  %s6 = inlined_call_operand.vmem [shape: f32[32,1], index: 6, kind: input, shape index: {}]
  %s7 = inlined_call_operand.vmem [shape: bf16[8,512], index: 7, kind: input, shape index: {}]
  %s8 = inlined_call_operand.vmem [shape: f32[8,1], index: 8, kind: input, shape index: {}]
  %s9 = inlined_call_operand.vmem [shape: bf16[8,128], index: 9, kind: input, shape index: {}]
  %s10 = inlined_call_operand.vmem [shape: bf16[32,128], index: 10, kind: input, shape index: {}]
  %s11 = inlined_call_operand.vmem [shape: f32[1,128], index: 11, kind: input, shape index: {}]
  %s12 = inlined_call_operand.vmem [shape: bf16[32,8], index: 12, kind: input, shape index: {}]
  %s13 = inlined_call_operand.vmem [shape: f32[1,8], index: 13, kind: input, shape index: {}]
  %s14 = inlined_call_operand.vmem [shape: f32[2,32], index: 14, kind: input, shape index: {}]
  %s15 = inlined_call_operand.vmem [shape: f32[2,32], index: 15, kind: input, shape index: {}]
  %s16 = inlined_call_operand.hbm [shape: f32[2,8], index: 16, kind: output, shape index: {0}]
  %s17 = inlined_call_operand.hbm [shape: f32[2,8], index: 17, kind: output, shape index: {1}]
  %s18 = inlined_call_operand.hbm [shape: f32[2,32], index: 18, kind: output, shape index: {2}]
  %s19 = inlined_call_operand.hbm [shape: f32[2,32], index: 19, kind: output, shape index: {3}]
  %20 = xla_tuple %s16, %s17, %s18, %s19
  %s21 = sld [smem:[#allocation0]]
  $region98: #{encode_decode.1} parent=0
    _
  %s23 = ssub.s32 1, %s21
  %s24 = scalar_select 0, %s23, %s21
  $region1: #{encode_decode.1} parent=0
    #allocation2 [shape = 'u8[1024]{0}', space=vmem, size = 0x400, scoped, tag = 'output window, operand 0, single buffered']
    #allocation3 [shape = 's32[1]{0}', space=sflag, size = 0x4, scoped, tag = 'scoped memory for encode_decode.1']
    #allocation4 [shape = 'u8[1024]{0}', space=vmem, size = 0x400, scoped, tag = 'output window, operand 1, single buffered']
    #allocation5 [shape = 's32[1]{0}', space=sflag, size = 0x4, scoped, tag = 'scoped memory for encode_decode.1']
    #allocation6 [shape = 'u8[1024]{0}', space=vmem, size = 0x400, scoped, tag = 'output window, operand 2, single buffered']
    #allocation7 [shape = 'u8[1024]{0}', space=vmem, size = 0x400, scoped, tag = 'output window, operand 3, single buffered']
    #allocation8 [shape = 's32[1]{0}', space=sflag, size = 0x4, scoped, tag = 'scoped memory for encode_decode.1']
    %25 = vsyncpa [#allocation3], 0
    %26 = vsyncpa [#allocation5], 0
    %27 = vsyncpa [#allocation8], 0
    // Predicated region
    $region2: #{encode_decode.1} parent=1 // pred_check
      _
    $region3: #{encode_decode.1} parent=1 // pred_check_branch
      %29 = sbr.rel (0) target = $region5
    $region4: #{encode_decode.1} parent=1 // pred_region
      _
    $region5: #{encode_decode.1} parent=1 // pred_fallthru
      _
    // Predicated region
    $region6: #{encode_decode.1} parent=1 // pred_check
      _
    $region7: #{encode_decode.1} parent=1 // pred_check_branch
      %31 = sbr.rel (0) target = $region9
    $region8: #{encode_decode.1} parent=1 // pred_region
      _
    $region9: #{encode_decode.1} parent=1 // pred_fallthru
      _
    // Predicated region
    $region10: #{encode_decode.1} parent=1 // pred_check
      _
    $region11: #{encode_decode.1} parent=1 // pred_check_branch
      %33 = sbr.rel (0) target = $region13
    $region12: #{encode_decode.1} parent=1 // pred_region
      _
    $region13: #{encode_decode.1} parent=1 // pred_fallthru
      _
    // Predicated region
    $region14: #{encode_decode.1} parent=1 // pred_check
      _
    $region15: #{encode_decode.1} parent=1 // pred_check_branch
      %35 = sbr.rel (0) target = $region17
    $region16: #{encode_decode.1} parent=1 // pred_region
      _
    $region17: #{encode_decode.1} parent=1 // pred_fallthru
      _
    // Predicated region
    $region18: #{encode_decode.1} parent=1 // pred_check
      _
    $region19: #{encode_decode.1} parent=1 // pred_check_branch
      %37 = sbr.rel (0) target = $region21
    $region20: #{encode_decode.1} parent=1 // pred_region
      _
    $region21: #{encode_decode.1} parent=1 // pred_fallthru
      _
    // Predicated region
    $region22: #{encode_decode.1} parent=1 // pred_check
      _
    $region23: #{encode_decode.1} parent=1 // pred_check_branch
      %39 = sbr.rel (0) target = $region25
    $region24: #{encode_decode.1} parent=1 // pred_region
      _
    $region25: #{encode_decode.1} parent=1 // pred_fallthru
      _
    // Predicated region
    $region26: #{encode_decode.1} parent=1 // pred_check
      _
    $region27: #{encode_decode.1} parent=1 // pred_check_branch
      %41 = sbr.rel (0) target = $region29
    $region28: #{encode_decode.1} parent=1 // pred_region
      _
    $region29: #{encode_decode.1} parent=1 // pred_fallthru
      _
    // Predicated region
    $region30: #{encode_decode.1} parent=1 // pred_check
      _
    $region31: #{encode_decode.1} parent=1 // pred_check_branch
      %43 = sbr.rel (0) target = $region33
    $region32: #{encode_decode.1} parent=1 // pred_region
      _
    $region33: #{encode_decode.1} parent=1 // pred_fallthru
      _
    // Predicated region
    $region34: #{encode_decode.1} parent=1 // pred_check
      _
    $region35: #{encode_decode.1} parent=1 // pred_check_branch
      %45 = sbr.rel (0) target = $region37
    $region36: #{encode_decode.1} parent=1 // pred_region
      _
    $region37: #{encode_decode.1} parent=1 // pred_fallthru
      _
    // Predicated region
    $region38: #{encode_decode.1} parent=1 // pred_check
      _
    $region39: #{encode_decode.1} parent=1 // pred_check_branch
      %47 = sbr.rel (0) target = $region41
    $region40: #{encode_decode.1} parent=1 // pred_region
      _
    $region41: #{encode_decode.1} parent=1 // pred_fallthru
      _
    // Predicated region
    $region42: #{encode_decode.1} parent=1 // pred_check
      _
    $region43: #{encode_decode.1} parent=1 // pred_check_branch
      %49 = sbr.rel (0) target = $region45
    $region44: #{encode_decode.1} parent=1 // pred_region
      _
    $region45: #{encode_decode.1} parent=1 // pred_fallthru
      _
    // Predicated region
    $region46: #{encode_decode.1} parent=1 // pred_check
      _
    $region47: #{encode_decode.1} parent=1 // pred_check_branch
      %51 = sbr.rel (0) target = $region49
    $region48: #{encode_decode.1} parent=1 // pred_region
      _
    $region49: #{encode_decode.1} parent=1 // pred_fallthru
      _
    // Predicated region
    $region50: #{encode_decode.1} parent=1 // pred_check
      _
    $region51: #{encode_decode.1} parent=1 // pred_check_branch
      %53 = sbr.rel (0) target = $region53
    $region52: #{encode_decode.1} parent=1 // pred_region
      _
    $region53: #{encode_decode.1} parent=1 // pred_fallthru
      _
    // Predicated region
    $region54: #{encode_decode.1} parent=1 // pred_check
      _
    $region55: #{encode_decode.1} parent=1 // pred_check_branch
      %55 = sbr.rel (0) target = $region57
    $region56: #{encode_decode.1} parent=1 // pred_region
      _
    $region57: #{encode_decode.1} parent=1 // pred_fallthru
      _
    // Predicated region
    $region58: #{encode_decode.1} parent=1 // pred_check
      _
    $region59: #{encode_decode.1} parent=1 // pred_check_branch
      %57 = sbr.rel (0) target = $region61
    $region60: #{encode_decode.1} parent=1 // pred_region
      _
    $region61: #{encode_decode.1} parent=1 // pred_fallthru
      _
    // Predicated region
    $region62: #{encode_decode.1} parent=1 // pred_check
      _
    $region63: #{encode_decode.1} parent=1 // pred_check_branch
      %59 = sbr.rel (0) target = $region65
    $region64: #{encode_decode.1} parent=1 // pred_region
      _
    $region65: #{encode_decode.1} parent=1 // pred_fallthru
      _
    %v61 = vld [vmem:[%s1] sm:$0xf]
    %v62 = vld [vmem:[%s0] sm:$0xff]
    %v63 = vld [vmem:[%s2] sm:$0xff]
    %65 = vset.pattern.permute.xlu0 0
    %66 = vperm.xlu0 %65, %v63
    %v67 = vpop.permute.xlu0 %66
    %70 = vst [vmem:[#allocation1] ss:$4 sm:$0xff] %v62
    %v71 = vld.sshfl [vmem:[#allocation1] sm:$0xff pattern:$0x73625140]
    %v72 = vld.sshfl [vmem:[#allocation1 + $0x8] sm:$0xff pattern:$0x73625140]
    %v73 = vld.sshfl [vmem:[#allocation1 + $0x10] sm:$0xff pattern:$0x73625140]
    %v74 = vld.sshfl [vmem:[#allocation1 + $0x18] sm:$0xff pattern:$0x73625140]
    %vm75 = vcmask 31744
    %v77 = vsel %vm75, %v61, 0
    %vm79 = vcmask 1041408
    %v80 = vsel %vm79, %v71, 0
    %v82 = vsel %vm79, %v72, 0
    %v84 = vsel %vm79, %v73, 0
    %v86 = vsel %vm79, %v74, 0
    %88 = vmatpush.bf16.msra.mxu0 0
    %89 = vmatpush.bf16.msra.mxu0 0
    %90 = vmatpush.bf16.msra.mxu0 0
    %91 = vmatpush.bf16.msra.mxu0 0
    %92 = vmatpush.bf16.msra.mxu0 0
    %93 = vmatpush.bf16.msra.mxu0 0
    %94 = vmatpush.bf16.msra.mxu0 0
    %95 = vmatpush.bf16.msra.mxu0 %v80
    %96 = vmatmul.bf16.gmra.mxu0 %v77
    %v97 = vpop.f32.mrf.mxu0
    %v98 = vadd.f32 %v67, %v97
    %v99 = vpop.f32.mrf.mxu0
    %100 = vdwg.mxu0
    %101 = vmatpush.bf16.msra.mxu0 0
    %102 = vmatpush.bf16.msra.mxu0 0
    %103 = vmatpush.bf16.msra.mxu0 0
    %104 = vmatpush.bf16.msra.mxu0 0
    %105 = vmatpush.bf16.msra.mxu0 0
    %106 = vmatpush.bf16.msra.mxu0 0
    %107 = vmatpush.bf16.msra.mxu0 0
    %108 = vmatpush.bf16.msra.mxu0 %v82
    %109 = vmatmul.bf16.gmra.mxu0 %v77
    %v110 = vpop.f32.mrf.mxu0
    %v111 = vadd.f32 %v67, %v110
    %v112 = vpop.f32.mrf.mxu0
    %113 = vdwg.mxu0
    %114 = vmatpush.bf16.msra.mxu0 0
    %115 = vmatpush.bf16.msra.mxu0 0
    %116 = vmatpush.bf16.msra.mxu0 0
    %117 = vmatpush.bf16.msra.mxu0 0
    %118 = vmatpush.bf16.msra.mxu0 0
    %119 = vmatpush.bf16.msra.mxu0 0
    %120 = vmatpush.bf16.msra.mxu0 0
    %121 = vmatpush.bf16.msra.mxu0 %v84
    %122 = vmatmul.bf16.gmra.mxu0 %v77
    %v123 = vpop.f32.mrf.mxu0
    %v124 = vadd.f32 %v67, %v123
    %v125 = vpop.f32.mrf.mxu0
    %126 = vdwg.mxu0
    %127 = vmatpush.bf16.msra.mxu0 0
    %128 = vmatpush.bf16.msra.mxu0 0
    %129 = vmatpush.bf16.msra.mxu0 0
    %130 = vmatpush.bf16.msra.mxu0 0
    %131 = vmatpush.bf16.msra.mxu0 0
    %132 = vmatpush.bf16.msra.mxu0 0
    %133 = vmatpush.bf16.msra.mxu0 0
    %134 = vmatpush.bf16.msra.mxu0 %v86
    %135 = vmatmul.bf16.gmra.mxu0 %v77
    %v136 = vpop.f32.mrf.mxu0
    %v137 = vadd.f32 %v67, %v136
    %v138 = vpop.f32.mrf.mxu0
    %139 = vdwg.mxu0
    %v140 = vmax.f32 %v98, 0.0
    %v141 = vmax.f32 %v111, 0.0
    %v142 = vmax.f32 %v124, 0.0
    %v143 = vmax.f32 %v137, 0.0
    %v144 = vld [vmem:[%s3] sm:$0xf]
    %v145 = vld [vmem:[%s3 + $0x4] sm:$0xf]
    %v146 = vpack.c.bf16 %v141, %v140
    %v147 = vpack.c.bf16 %v143, %v142
    %v148 = vld [vmem:[%s4] sm:$0xff]
    %v149 = vld [vmem:[%s4 + $0x8] sm:$0xff]
    %151 = vset.pattern.permute.xlu0 0
    %152 = vperm.xlu0 %151, %v148
    %v153 = vpop.permute.xlu0 %152
    %156 = vset.pattern.permute.xlu0 0
    %157 = vperm.xlu0 %156, %v149
    %v158 = vpop.permute.xlu0 %157
    %v162 = vunpack.c.l.b16 %v144
    %v163 = vunpack.c.l.b16 %v145
    %v164 = vpack.c.b16 %v163, %v162
    %vm165 = vcmask 261120
    %v167 = vsel %vm165, %v164, 0
    %169 = vmatpush.bf16.msra.mxu0 0
    %170 = vmatpush.bf16.msra.mxu0 0
    %171 = vmatpush.bf16.msra.mxu0 0
    %172 = vmatpush.bf16.msra.mxu0 0
    %173 = vmatpush.bf16.msra.mxu0 0
    %174 = vmatpush.bf16.msra.mxu0 0
    %175 = vmatpush.bf16.msra.mxu0 %v147
    %176 = vmatpush.bf16.msra.mxu0 %v146
    %177 = vmatmul.bf16.gmra.mxu0 %v167
    %v178 = vpop.f32.mrf.mxu0
    %v179 = vadd.f32 %v153, %v178
    %v180 = vpop.f32.mrf.mxu0
    %v181 = vadd.f32 %v158, %v180
    %182 = vdwg.mxu0
    %v183 = vmax.f32 %v179, 0.0
    %v184 = vmax.f32 %v181, 0.0
    %187 = vrot.lane.b32.xlu0 %v183, 96
    %v188 = vpop.permute.xlu0 %187
    %189 = vrot.lane.b32.xlu0 %v184, 96
    %v190 = vpop.permute.xlu0 %189
    %193 = vrot.lane.b32.xlu0 %v183, 64
    %v194 = vpop.permute.xlu0 %193
    %195 = vrot.lane.b32.xlu0 %v184, 64
    %v196 = vpop.permute.xlu0 %195
    %199 = vrot.lane.b32.xlu0 %v183, 32
    %v200 = vpop.permute.xlu0 %199
    %201 = vrot.lane.b32.xlu0 %v184, 32
    %v202 = vpop.permute.xlu0 %201
    %v205 = vld [vmem:[%s5] sm:$0xf]
    %v206 = vld [vmem:[%s5 + $0x4] sm:$0xf]
    %v207 = vld [vmem:[%s5 + $0x8] sm:$0xf]
    %v208 = vld [vmem:[%s5 + $0xc] sm:$0xf]
    %v209 = vpack.c.bf16 %v184, %v183
    %v210 = vpack.c.bf16 %v190, %v188
    %v211 = vpack.c.bf16 %v196, %v194
    %v212 = vpack.c.bf16 %v202, %v200
    %v213 = vld [vmem:[%s6] sm:$0xff]
    %v214 = vld [vmem:[%s6 + $0x8] sm:$0xff]
    %v215 = vld [vmem:[%s6 + $0x10] sm:$0xff]
    %v216 = vld [vmem:[%s6 + $0x18] sm:$0xff]
    %218 = vset.pattern.permute.xlu0 0
    %219 = vperm.xlu0 %218, %v213
    %v220 = vpop.permute.xlu0 %219
    %223 = vset.pattern.permute.xlu0 0
    %224 = vperm.xlu0 %223, %v214
    %v225 = vpop.permute.xlu0 %224
    %228 = vset.pattern.permute.xlu0 0
    %229 = vperm.xlu0 %228, %v215
    %v230 = vpop.permute.xlu0 %229
    %233 = vset.pattern.permute.xlu0 0
    %234 = vperm.xlu0 %233, %v216
    %v235 = vpop.permute.xlu0 %234
    %v241 = vunpack.c.l.b16 %v205
    %v242 = vunpack.c.l.b16 %v206
    %v243 = vunpack.c.l.b16 %v207
    %v244 = vunpack.c.l.b16 %v208
    %v245 = vpack.c.b16 %v242, %v241
    %v246 = vpack.c.b16 %v244, %v243
    %vm247 = vcmask 523264
    %v249 = vsel %vm247, %v245, 0
    %v252 = vsel %vm247, %v246, 0
    %254 = vmatpush.bf16.msra.mxu0 0
    %255 = vmatpush.bf16.msra.mxu0 0
    %256 = vmatpush.bf16.msra.mxu0 0
    %257 = vmatpush.bf16.msra.mxu0 0
    %258 = vmatpush.bf16.msra.mxu0 %v212
    %259 = vmatpush.bf16.msra.mxu0 %v211
    %260 = vmatpush.bf16.msra.mxu0 %v210
    %261 = vmatpush.bf16.msra.mxu0 %v209
    %262 = vmatmul.bf16.gmra.mxu0 %v249
    %v263 = vpop.f32.mrf.mxu0
    %v264 = vadd.f32 %v220, %v263
    %v265 = vpop.f32.mrf.mxu0
    %v266 = vadd.f32 %v225, %v265
    %267 = vmatmul.bf16.gmra.mxu0 %v252
    %v268 = vpop.f32.mrf.mxu0
    %v269 = vadd.f32 %v230, %v268
    %v270 = vpop.f32.mrf.mxu0
    %v271 = vadd.f32 %v235, %v270
    %272 = vdwg.mxu0
    %v273 = vmax.f32 %v264, 0.0
    %v274 = vmax.f32 %v266, 0.0
    %v275 = vmax.f32 %v269, 0.0
    %v276 = vmax.f32 %v271, 0.0
    %281 = vrot.lane.b32.xlu0 %v273, 126
    %v282 = vpop.permute.xlu0 %281
    %283 = vrot.lane.b32.xlu0 %v274, 126
    %v284 = vpop.permute.xlu0 %283
    %285 = vrot.lane.b32.xlu0 %v275, 126
    %v286 = vpop.permute.xlu0 %285
    %287 = vrot.lane.b32.xlu0 %v276, 126
    %v288 = vpop.permute.xlu0 %287
    %293 = vrot.lane.b32.xlu0 %v273, 124
    %v294 = vpop.permute.xlu0 %293
    %295 = vrot.lane.b32.xlu0 %v274, 124
    %v296 = vpop.permute.xlu0 %295
    %297 = vrot.lane.b32.xlu0 %v275, 124
    %v298 = vpop.permute.xlu0 %297
    %299 = vrot.lane.b32.xlu0 %v276, 124
    %v300 = vpop.permute.xlu0 %299
    %305 = vrot.lane.b32.xlu0 %v273, 122
    %v306 = vpop.permute.xlu0 %305
    %307 = vrot.lane.b32.xlu0 %v274, 122
    %v308 = vpop.permute.xlu0 %307
    %309 = vrot.lane.b32.xlu0 %v275, 122
    %v310 = vpop.permute.xlu0 %309
    %311 = vrot.lane.b32.xlu0 %v276, 122
    %v312 = vpop.permute.xlu0 %311
    %317 = vrot.lane.b32.xlu0 %v273, 120
    %v318 = vpop.permute.xlu0 %317
    %319 = vrot.lane.b32.xlu0 %v274, 120
    %v320 = vpop.permute.xlu0 %319
    %321 = vrot.lane.b32.xlu0 %v275, 120
    %v322 = vpop.permute.xlu0 %321
    %323 = vrot.lane.b32.xlu0 %v276, 120
    %v324 = vpop.permute.xlu0 %323
    %329 = vrot.lane.b32.xlu0 %v273, 118
    %v330 = vpop.permute.xlu0 %329
    %331 = vrot.lane.b32.xlu0 %v274, 118
    %v332 = vpop.permute.xlu0 %331
    %333 = vrot.lane.b32.xlu0 %v275, 118
    %v334 = vpop.permute.xlu0 %333
    %335 = vrot.lane.b32.xlu0 %v276, 118
    %v336 = vpop.permute.xlu0 %335
    %341 = vrot.lane.b32.xlu0 %v273, 116
    %v342 = vpop.permute.xlu0 %341
    %343 = vrot.lane.b32.xlu0 %v274, 116
    %v344 = vpop.permute.xlu0 %343
    %345 = vrot.lane.b32.xlu0 %v275, 116
    %v346 = vpop.permute.xlu0 %345
    %347 = vrot.lane.b32.xlu0 %v276, 116
    %v348 = vpop.permute.xlu0 %347
    %353 = vrot.lane.b32.xlu0 %v273, 114
    %v354 = vpop.permute.xlu0 %353
    %355 = vrot.lane.b32.xlu0 %v274, 114
    %v356 = vpop.permute.xlu0 %355
    %357 = vrot.lane.b32.xlu0 %v275, 114
    %v358 = vpop.permute.xlu0 %357
    %359 = vrot.lane.b32.xlu0 %v276, 114
    %v360 = vpop.permute.xlu0 %359
    %365 = vrot.lane.b32.xlu0 %v273, 112
    %v366 = vpop.permute.xlu0 %365
    %367 = vrot.lane.b32.xlu0 %v274, 112
    %v368 = vpop.permute.xlu0 %367
    %369 = vrot.lane.b32.xlu0 %v275, 112
    %v370 = vpop.permute.xlu0 %369
    %371 = vrot.lane.b32.xlu0 %v276, 112
    %v372 = vpop.permute.xlu0 %371
    %377 = vrot.lane.b32.xlu0 %v273, 110
    %v378 = vpop.permute.xlu0 %377
    %379 = vrot.lane.b32.xlu0 %v274, 110
    %v380 = vpop.permute.xlu0 %379
    %381 = vrot.lane.b32.xlu0 %v275, 110
    %v382 = vpop.permute.xlu0 %381
    %383 = vrot.lane.b32.xlu0 %v276, 110
    %v384 = vpop.permute.xlu0 %383
    %389 = vrot.lane.b32.xlu0 %v273, 108
    %v390 = vpop.permute.xlu0 %389
    %391 = vrot.lane.b32.xlu0 %v274, 108
    %v392 = vpop.permute.xlu0 %391
    %393 = vrot.lane.b32.xlu0 %v275, 108
    %v394 = vpop.permute.xlu0 %393
    %395 = vrot.lane.b32.xlu0 %v276, 108
    %v396 = vpop.permute.xlu0 %395
    %401 = vrot.lane.b32.xlu0 %v273, 106
    %v402 = vpop.permute.xlu0 %401
    %403 = vrot.lane.b32.xlu0 %v274, 106
    %v404 = vpop.permute.xlu0 %403
    %405 = vrot.lane.b32.xlu0 %v275, 106
    %v406 = vpop.permute.xlu0 %405
    %407 = vrot.lane.b32.xlu0 %v276, 106
    %v408 = vpop.permute.xlu0 %407
    %413 = vrot.lane.b32.xlu0 %v273, 104
    %v414 = vpop.permute.xlu0 %413
    %415 = vrot.lane.b32.xlu0 %v274, 104
    %v416 = vpop.permute.xlu0 %415
    %417 = vrot.lane.b32.xlu0 %v275, 104
    %v418 = vpop.permute.xlu0 %417
    %419 = vrot.lane.b32.xlu0 %v276, 104
    %v420 = vpop.permute.xlu0 %419
    %425 = vrot.lane.b32.xlu0 %v273, 102
    %v426 = vpop.permute.xlu0 %425
    %427 = vrot.lane.b32.xlu0 %v274, 102
    %v428 = vpop.permute.xlu0 %427
    %429 = vrot.lane.b32.xlu0 %v275, 102
    %v430 = vpop.permute.xlu0 %429
    %431 = vrot.lane.b32.xlu0 %v276, 102
    %v432 = vpop.permute.xlu0 %431
    %437 = vrot.lane.b32.xlu0 %v273, 100
    %v438 = vpop.permute.xlu0 %437
    %439 = vrot.lane.b32.xlu0 %v274, 100
    %v440 = vpop.permute.xlu0 %439
    %441 = vrot.lane.b32.xlu0 %v275, 100
    %v442 = vpop.permute.xlu0 %441
    %443 = vrot.lane.b32.xlu0 %v276, 100
    %v444 = vpop.permute.xlu0 %443
    %449 = vrot.lane.b32.xlu0 %v273, 98
    %v450 = vpop.permute.xlu0 %449
    %451 = vrot.lane.b32.xlu0 %v274, 98
    %v452 = vpop.permute.xlu0 %451
    %453 = vrot.lane.b32.xlu0 %v275, 98
    %v454 = vpop.permute.xlu0 %453
    %455 = vrot.lane.b32.xlu0 %v276, 98
    %v456 = vpop.permute.xlu0 %455
    %v461 = vld [vmem:[%s7] sm:$0xff]
    %v462 = vld [vmem:[%s7 + $0x8] sm:$0xff]
    %v463 = vpack.c.bf16 %v274, %v273
    %v464 = vpack.c.bf16 %v276, %v275
    %v465 = vpack.c.bf16 %v284, %v282
    %v466 = vpack.c.bf16 %v288, %v286
    %v467 = vpack.c.bf16 %v296, %v294
    %v468 = vpack.c.bf16 %v300, %v298
    %v469 = vpack.c.bf16 %v308, %v306
    %v470 = vpack.c.bf16 %v312, %v310
    %v471 = vpack.c.bf16 %v320, %v318
    %v472 = vpack.c.bf16 %v324, %v322
    %v473 = vpack.c.bf16 %v332, %v330
    %v474 = vpack.c.bf16 %v336, %v334
    %v475 = vpack.c.bf16 %v344, %v342
    %v476 = vpack.c.bf16 %v348, %v346
    %v477 = vpack.c.bf16 %v356, %v354
    %v478 = vpack.c.bf16 %v360, %v358
    %v479 = vpack.c.bf16 %v368, %v366
    %v480 = vpack.c.bf16 %v372, %v370
    %v481 = vpack.c.bf16 %v380, %v378
    %v482 = vpack.c.bf16 %v384, %v382
    %v483 = vpack.c.bf16 %v392, %v390
    %v484 = vpack.c.bf16 %v396, %v394
    %v485 = vpack.c.bf16 %v404, %v402
    %v486 = vpack.c.bf16 %v408, %v406
    %v487 = vpack.c.bf16 %v416, %v414
    %v488 = vpack.c.bf16 %v420, %v418
    %v489 = vpack.c.bf16 %v428, %v426
    %v490 = vpack.c.bf16 %v432, %v430
    %v491 = vpack.c.bf16 %v440, %v438
    %v492 = vpack.c.bf16 %v444, %v442
    %v493 = vpack.c.bf16 %v452, %v450
    %v494 = vpack.c.bf16 %v456, %v454
    %v495 = vld [vmem:[%s8] sm:$0xff]
    %497 = vset.pattern.permute.xlu0 0
    %498 = vperm.xlu0 %497, %v495
    %v499 = vpop.permute.xlu0 %498
    %v503 = vunpack.c.l.b16 %v461
    %v504 = vunpack.c.h.b16 %v461
    %v505 = vunpack.c.l.b16 %v462
    %v506 = vunpack.c.h.b16 %v462
    %v507 = vpack.c.b16 %v503, %v503
    %v508 = vpack.c.b16 %v504, %v504
    %v509 = vpack.c.b16 %v505, %v505
    %v510 = vpack.c.b16 %v506, %v506
    %515 = vmatpush.bf16.msra.mxu0 %v470
    %516 = vmatpush.bf16.msra.mxu0 %v469
    %517 = vmatpush.bf16.msra.mxu0 %v468
    %518 = vmatpush.bf16.msra.mxu0 %v467
    %519 = vmatpush.bf16.msra.mxu0 %v466
    %520 = vmatpush.bf16.msra.mxu0 %v465
    %521 = vmatpush.bf16.msra.mxu0 %v464
    %522 = vmatpush.bf16.msra.mxu0 %v463
    %523 = vmatmul.bf16.gmra.mxu0 %v507
    %v524 = vpop.f32.mrf.mxu0
    %v525 = vadd.f32 %v499, %v524
    %v526 = vpop.f32.mrf.mxu0
    %527 = vdwg.mxu0
    %528 = vmatpush.bf16.msra.mxu0 %v478
    %529 = vmatpush.bf16.msra.mxu0 %v477
    %530 = vmatpush.bf16.msra.mxu0 %v476
    %531 = vmatpush.bf16.msra.mxu0 %v475
    %532 = vmatpush.bf16.msra.mxu0 %v474
    %533 = vmatpush.bf16.msra.mxu0 %v473
    %534 = vmatpush.bf16.msra.mxu0 %v472
    %535 = vmatpush.bf16.msra.mxu0 %v471
    %536 = vmatmul.bf16.gmra.mxu0 %v508
    %v537 = vpop.f32.mrf.mxu0
    %v538 = vadd.f32 %v525, %v537
    %v539 = vpop.f32.mrf.mxu0
    %540 = vdwg.mxu0
    %541 = vmatpush.bf16.msra.mxu0 %v486
    %542 = vmatpush.bf16.msra.mxu0 %v485
    %543 = vmatpush.bf16.msra.mxu0 %v484
    %544 = vmatpush.bf16.msra.mxu0 %v483
    %545 = vmatpush.bf16.msra.mxu0 %v482
    %546 = vmatpush.bf16.msra.mxu0 %v481
    %547 = vmatpush.bf16.msra.mxu0 %v480
    %548 = vmatpush.bf16.msra.mxu0 %v479
    %549 = vmatmul.bf16.gmra.mxu0 %v509
    %v550 = vpop.f32.mrf.mxu0
    %v551 = vadd.f32 %v538, %v550
    %v552 = vpop.f32.mrf.mxu0
    %553 = vdwg.mxu0
    %554 = vmatpush.bf16.msra.mxu0 %v494
    %555 = vmatpush.bf16.msra.mxu0 %v493
    %556 = vmatpush.bf16.msra.mxu0 %v492
    %557 = vmatpush.bf16.msra.mxu0 %v491
    %558 = vmatpush.bf16.msra.mxu0 %v490
    %559 = vmatpush.bf16.msra.mxu0 %v489
    %560 = vmatpush.bf16.msra.mxu0 %v488
    %561 = vmatpush.bf16.msra.mxu0 %v487
    %562 = vmatmul.bf16.gmra.mxu0 %v510
    %v563 = vpop.f32.mrf.mxu0
    %v564 = vadd.f32 %v551, %v563
    %v565 = vpop.f32.mrf.mxu0
    %566 = vdwg.mxu0
    %v567 = vlaneseq
    %v568 = vshrl.u32 %v567, 7
    %v569 = vlaneseq
    %v570 = vand.u32 %v569, 127
    %vm571 = vcmp.eq.s32.totalorder %v568, %v570
    %v572 = vsel %vm571, 1, 0
    %v573 = vcvt.s32.f32 %v572
    %vm574 = vcmask 15360
    %v576 = vsel %vm574, %v573, 0
    %v579 = vsel %vm574, %v564, 0
    %581 = vmatpush.xpose.msra.mxu0 0.0
    %582 = vmatpush.xpose.msra.mxu0 0.0
    %583 = vmatpush.xpose.msra.mxu0 0.0
    %584 = vmatpush.xpose.msra.mxu0 0.0
    %585 = vmatpush.xpose.msra.mxu0 0.0
    %586 = vmatpush.xpose.msra.mxu0 0.0
    %587 = vmatpush.xpose.msra.mxu0 0.0
    %588 = vmatpush.xpose.msra.mxu0 0.0
    %589 = vmatpush.xpose.msra.mxu0 0.0
    %590 = vmatpush.xpose.msra.mxu0 0.0
    %591 = vmatpush.xpose.msra.mxu0 0.0
    %592 = vmatpush.xpose.msra.mxu0 0.0
    %593 = vmatpush.xpose.msra.mxu0 0.0
    %594 = vmatpush.xpose.msra.mxu0 0.0
    %595 = vmatpush.xpose.msra.mxu0 0.0
    %596 = vmatpush.xpose.msra.mxu0 %v579
    %597 = vmatmul.f32.gmra.mxu0 %v576
    %v598 = vpop.f32.mrf.mxu0
    %v599 = vadd.f32 0.0, %v598
    %600 = vdwg.mxu0
    %v601 = vld [vmem:[%s14] sm:$0x3]
    %v602 = vld [vmem:[%s15] sm:$0x3]
    %v603 = vpack.c.bf16 %v599, %v599
    %v604 = vld [vmem:[%s9] sm:$0xf]
    %v605 = vpack.c.bf16 %v601, %v601
    %v606 = vld [vmem:[%s10] sm:$0xf]
    %v607 = vld [vmem:[%s10 + $0x4] sm:$0xf]
    %v608 = vld [vmem:[%s10 + $0x8] sm:$0xf]
    %v609 = vld [vmem:[%s10 + $0xc] sm:$0xf]
    %v614 = vunpack.c.l.b16 %v606
    %v615 = vunpack.c.l.b16 %v607
    %v616 = vunpack.c.l.b16 %v608
    %v617 = vunpack.c.l.b16 %v609
    %v618 = vpack.c.b16 %v615, %v614
    %v619 = vpack.c.b16 %v617, %v616
    %v623 = vsel %vm165, %v605, 0
    %625 = vmatpush.bf16.msra.mxu0 0
    %626 = vmatpush.bf16.msra.mxu0 0
    %627 = vmatpush.bf16.msra.mxu0 0
    %628 = vmatpush.bf16.msra.mxu0 0
    %629 = vmatpush.bf16.msra.mxu0 0
    %630 = vmatpush.bf16.msra.mxu0 0
    %631 = vmatpush.bf16.msra.mxu0 %v619
    %632 = vmatpush.bf16.msra.mxu0 %v618
    %633 = vmatmul.bf16.gmra.mxu0 %v623
    %v634 = vpop.f32.mrf.mxu0
    %v635 = vadd.f32 0.0, %v634
    %v636 = vpop.f32.mrf.mxu0
    %637 = vdwg.mxu0
    %vm638 = vcmask 64512
    %v640 = vsel %vm638, %v603, 0
    %vm642 = vcmask 1043456
    %v644 = vsel %vm642, %v604, 0
    %646 = vmatpush.bf16.msra.mxu0 0
    %647 = vmatpush.bf16.msra.mxu0 0
    %648 = vmatpush.bf16.msra.mxu0 0
    %649 = vmatpush.bf16.msra.mxu0 0
    %650 = vmatpush.bf16.msra.mxu0 0
    %651 = vmatpush.bf16.msra.mxu0 0
    %652 = vmatpush.bf16.msra.mxu0 0
    %653 = vmatpush.bf16.msra.mxu0 %v644
    %654 = vmatmul.bf16.gmra.mxu0 %v640
    %v655 = vpop.f32.mrf.mxu0
    %v656 = vadd.f32 %v635, %v655
    %v657 = vpop.f32.mrf.mxu0
    %658 = vdwg.mxu0
    %v659 = vld [vmem:[%s11] sm:$0x1]
    %v661 = vperm.slane %v659, 0
    %v663 = vadd.f32 %v656, %v661
    %v664 = vxor.u32 %v663, 2147483648
    %v665 = vmul.f32 %v664, 1.442695
    %v666 = vpow.pop %v665
    %v667 = vadd.f32 %v666, 1.0
    %v668 = vrcp.pop %v667
    %v669 = vmul.f32 %v667, %v668
    %v670 = vsub.f32 1.0, %v669
    %v671 = vmul.f32 %v668, %v670
    %v672 = vadd.f32 %v668, %v671
    %vm673 = vweird.f32 %v667
    %vm674 = vweird.f32 %v668
    %vm675 = vmor %vm673, %vm674
    %v676 = vsel %vm675, %v668, %v672
    %v677 = vand.u32 2147483647, %v667
    %vm678 = vcmp.eq.f32.partialorder %v677, 8.507059e+37
    %v679 = vand.u32 %v667, 2147483648
    %v680 = vor.u32 1.1754944e-38, %v679
    %v681 = vsel %vm678, %v680, %v676
    %v682 = vmul.f32 1.0, %v681
    %v683 = vtanh.pop %v663
    %685 = vrot.lane.b32.xlu0 %v602, 32
    %v686 = vpop.permute.xlu0 %685
    %v688 = vmul.f32 %v682, %v686
    %690 = vrot.lane.b32.xlu0 %v683, 64
    %v691 = vpop.permute.xlu0 %690
    %v693 = vmul.f32 %v682, %v691
    %695 = vrot.lane.b32.xlu0 %v693, 32
    %v696 = vpop.permute.xlu0 %695
    %v698 = vadd.f32 %v688, %v696
    %v699 = vtanh.pop %v698
    %701 = vrot.lane.b32.xlu0 %v699, 64
    %v702 = vpop.permute.xlu0 %701
    %v704 = vmul.f32 %v682, %v702
    %v705 = vpack.c.bf16 %v704, %v704
    %v706 = vld [vmem:[%s12] sm:$0xf]
    %v707 = vld [vmem:[%s12 + $0x4] sm:$0xf]
    %v708 = vld [vmem:[%s12 + $0x8] sm:$0xf]
    %v709 = vld [vmem:[%s12 + $0xc] sm:$0xf]
    %v710 = vld [vmem:[%s13] sm:$0x1]
    %v712 = vperm.slane %v710, 0
    %715 = vrot.lane.b32.xlu0 %v705, 32
    %v716 = vpop.permute.xlu0 %715
    %v721 = vunpack.c.l.b16 %v706
    %v722 = vunpack.c.l.b16 %v707
    %v723 = vunpack.c.l.b16 %v708
    %v724 = vunpack.c.l.b16 %v709
    %v725 = vpack.c.b16 %v722, %v721
    %v726 = vpack.c.b16 %v724, %v723
    %v730 = vsel %vm165, %v716, 0
    %732 = vmatpush.bf16.msra.mxu0 0
    %733 = vmatpush.bf16.msra.mxu0 0
    %734 = vmatpush.bf16.msra.mxu0 0
    %735 = vmatpush.bf16.msra.mxu0 0
    %736 = vmatpush.bf16.msra.mxu0 0
    %737 = vmatpush.bf16.msra.mxu0 0
    %738 = vmatpush.bf16.msra.mxu0 %v726
    %739 = vmatpush.bf16.msra.mxu0 %v725
    %740 = vmatmul.bf16.gmra.mxu0 %v730
    %v741 = vpop.f32.mrf.mxu0
    %v742 = vadd.f32 %v712, %v741
    %v743 = vpop.f32.mrf.mxu0
    %744 = vdwg.mxu0
    %vm745 = vcmask 58368
    %746 = vst.msk [vmem:[#allocation2] sm:$0x3] %vm745, %v599
    %747 = vst.msk [vmem:[#allocation4] sm:$0x3] %vm745, %v742
    %749 = vrot.lane.b32.xlu0 %v704, 32
    %v750 = vpop.permute.xlu0 %749
    %vm752 = vcmask 254976
    %753 = vst.msk [vmem:[#allocation6] sm:$0x3] %vm752, %v750
    %755 = vrot.lane.b32.xlu0 %v698, 96
    %v756 = vpop.permute.xlu0 %755
    %758 = vst.msk [vmem:[#allocation7] sm:$0x3] %vm752, %v756
    // Predicated region
    $region66: #{encode_decode.1} parent=1 // pred_check
      _
    $region67: #{encode_decode.1} parent=1 // pred_check_branch
      %760 = sbr.rel (0) target = $region69
    $region68: #{encode_decode.1} parent=1 // pred_region
      %762 = vsyncadd [#allocation3], 0
      %s764 = sshll.u32 [#allocation2], 4
      %s765 = int_to_ptr.vmem [resolvable:$true] %s764
      %s766 = sshll.u32 %s16, 4
      %s767 = int_to_ptr.hbm [resolvable:$true] %s766
      %769 = dma.vmem_to_hbm [thread:$0]  %s765, 32, %s767, [#allocation3]
    $region69: #{encode_decode.1} parent=1 // pred_fallthru
      _
    // Predicated region
    $region70: #{encode_decode.1} parent=1 // pred_check
      _
    $region71: #{encode_decode.1} parent=1 // pred_check_branch
      %771 = sbr.rel (0) target = $region73
    $region72: #{encode_decode.1} parent=1 // pred_region
      %773 = vsyncadd [#allocation5], 0
      %s775 = sshll.u32 [#allocation4], 4
      %s776 = int_to_ptr.vmem [resolvable:$true] %s775
      %s777 = sshll.u32 %s17, 4
      %s778 = int_to_ptr.hbm [resolvable:$true] %s777
      %780 = dma.vmem_to_hbm [thread:$0]  %s776, 32, %s778, [#allocation5]
    $region73: #{encode_decode.1} parent=1 // pred_fallthru
      _
    // Predicated region
    $region74: #{encode_decode.1} parent=1 // pred_check
      _
    $region75: #{encode_decode.1} parent=1 // pred_check_branch
      %782 = sbr.rel (0) target = $region77
    $region76: #{encode_decode.1} parent=1 // pred_region
      %784 = vsyncadd [#allocation5], 0
      %s786 = sshll.u32 [#allocation6], 4
      %s787 = int_to_ptr.vmem [resolvable:$true] %s786
      %s788 = sshll.u32 %s18, 4
      %s789 = int_to_ptr.hbm [resolvable:$true] %s788
      %791 = dma.vmem_to_hbm [thread:$0]  %s787, 32, %s789, [#allocation5]
    $region77: #{encode_decode.1} parent=1 // pred_fallthru
      _
    // Predicated region
    $region78: #{encode_decode.1} parent=1 // pred_check
      _
    $region79: #{encode_decode.1} parent=1 // pred_check_branch
      %793 = sbr.rel (0) target = $region81
    $region80: #{encode_decode.1} parent=1 // pred_region
      %795 = vsyncadd [#allocation8], 0
      %s797 = sshll.u32 [#allocation7], 4
      %s798 = int_to_ptr.vmem [resolvable:$true] %s797
      %s799 = sshll.u32 %s19, 4
      %s800 = int_to_ptr.hbm [resolvable:$true] %s799
      %802 = dma.vmem_to_hbm [thread:$0]  %s798, 32, %s800, [#allocation8]
    $region81: #{encode_decode.1} parent=1 // pred_fallthru
      _
    // Predicated region
    $region82: #{encode_decode.1} parent=1 // pred_check
      _
    $region83: #{encode_decode.1} parent=1 // pred_check_branch
      %804 = sbr.rel (0) target = $region85
    $region84: #{encode_decode.1} parent=1 // pred_region
      %806 = dma.done [#allocation3], 32
    $region85: #{encode_decode.1} parent=1 // pred_fallthru
      _
    // Predicated region
    $region86: #{encode_decode.1} parent=1 // pred_check
      _
    $region87: #{encode_decode.1} parent=1 // pred_check_branch
      %808 = sbr.rel (0) target = $region89
    $region88: #{encode_decode.1} parent=1 // pred_region
      %810 = dma.done [#allocation5], 32
    $region89: #{encode_decode.1} parent=1 // pred_fallthru
      _
    // Predicated region
    $region90: #{encode_decode.1} parent=1 // pred_check
      _
    $region91: #{encode_decode.1} parent=1 // pred_check_branch
      %812 = sbr.rel (0) target = $region93
    $region92: #{encode_decode.1} parent=1 // pred_region
      %814 = dma.done [#allocation5], 32
    $region93: #{encode_decode.1} parent=1 // pred_fallthru
      _
    // Predicated region
    $region94: #{encode_decode.1} parent=1 // pred_check
      _
    $region95: #{encode_decode.1} parent=1 // pred_check_branch
      %816 = sbr.rel (0) target = $region97
    $region96: #{encode_decode.1} parent=1 // pred_region
      %818 = dma.done [#allocation8], 32
    $region97: #{encode_decode.1} parent=1 // pred_fallthru
      _
    %819 = vsyncpa [#allocation3], 1
    %820 = vsyncpa [#allocation5], 1
    %821 = vsyncpa [#allocation8], 1

</llo_original>
